<compile_context>
chip_gen: v6e
topology: v6e:2x2x1
jax: 0.10.0
libtpu: 0.0.40
codegen_flags: <defaults>
</compile_context>

<pallas_src>
import jax
import jax.numpy as jnp
from jax.experimental import pallas as pl
from jax.experimental.pallas import tpu as pltpu

NEG_SLOPE = 0.01  # torch.nn.LeakyReLU default


def _leaky_relu(x):
    return jnp.where(x > 0, x, NEG_SLOPE * x)


def _round_up(x, m):
    return (x + m - 1) // m * m


def _dti_edge_mlp_kernel(x_ref, w1_ref, b1_ref, w2_ref, b2_ref, w3_ref, b3_ref,
                         o_ref):
    """x_ref: [tile, De+Dh] fused (e | h_u + h_v).  3-layer MLP with LeakyReLU."""
    cdt = w1_ref.dtype  # compute (stream) dtype: bf16 or f32

    # Layer 1: concat([e, m]) @ W1 + b1  (concat pre-fused in the wrapper).
    h = jnp.dot(x_ref[...], w1_ref[...],
                preferred_element_type=jnp.float32) + b1_ref[...]
    h = _leaky_relu(h)

    # Layer 2
    h = jnp.dot(h.astype(cdt), w2_ref[...],
                preferred_element_type=jnp.float32) + b2_ref[...]
    h = _leaky_relu(h)

    # Layer 3
    h = jnp.dot(h.astype(cdt), w3_ref[...],
                preferred_element_type=jnp.float32) + b3_ref[...]
    h = _leaky_relu(h)

    o_ref[...] = h.astype(o_ref.dtype)


def dti_conv_graph3(atom_feats, bond_feats, src, dst, params, *,
                    tile_e=4096, compute_dtype=jnp.bfloat16, out_dtype=None):
    """atom_feats: [N, Dh], bond_feats: [E, De], src/dst: [E] int32.

    params: dict with w1 [De+Dh, Dout], b1 [Dout], w2 [Dout, Dout], b2 [Dout],
            w3 [Dout, Dout], b3 [Dout]  (weights stored as [in, out]; a torch
            nn.Linear weight would be transposed into this layout).
    Returns updated edge features [E, Dout].
    """
    E, De = bond_feats.shape
    _, Dh = atom_feats.shape
    Din = De + Dh
    Dout = params["w1"].shape[1]
    out_dtype = bond_feats.dtype if out_dtype is None else out_dtype
    cdt = compute_dtype

    # --- Glue (plain XLA): gather endpoints, u_add_v message, fuse concat.
    #     Cast the parts before concat so the slab is materialized directly in
    #     the compute dtype (no extra f32 pass over [E, Din]). ---
    hu = jnp.take(atom_feats, src, axis=0)              # [E, Dh]
    hv = jnp.take(atom_feats, dst, axis=0)              # [E, Dh]
    x_c = jnp.concatenate(
        [bond_feats.astype(cdt), (hu + hv).astype(cdt)], axis=1)  # [E, Din]

    # --- Tile choice: large tiles amortize per-step overhead; keep >= 2 grid
    #     steps when possible so the "parallel" axis can shard across v7x's
    #     two TensorCores.  Rows kept a multiple of 16 (bf16 sublane packing,
    #     also satisfies the f32 multiple-of-8 rule). ---
    tile = max(16, _round_up(min(tile_e, E), 16))
    if E > 16:
        tile = min(tile, _round_up(pl.cdiv(E, 2), 16))
    grid_len = pl.cdiv(E, tile)
    e_pad = grid_len * tile
    if e_pad != E:
        x_c = jnp.pad(x_c, ((0, e_pad - E), (0, 0)))

    # --- Weights stream in compute dtype; biases stay f32 so bias-add and
    #     LeakyReLU run in f32 (v5e-safe). ---
    w1 = params["w1"].astype(cdt)
    w2 = params["w2"].astype(cdt)
    w3 = params["w3"].astype(cdt)
    b1 = params["b1"].astype(jnp.float32).reshape(1, Dout)
    b2 = params["b2"].astype(jnp.float32).reshape(1, Dout)
    b3 = params["b3"].astype(jnp.float32).reshape(1, Dout)

    edge_spec = lambda d: pl.BlockSpec((tile, d), lambda i: (i, 0))
    # Constant index_map -> logically resident across the grid.
    resident = lambda r, c: pl.BlockSpec((r, c), lambda i: (0, 0))

    out = pl.pallas_call(
        _dti_edge_mlp_kernel,
        out_shape=jax.ShapeDtypeStruct((e_pad, Dout), out_dtype),
        grid_spec=pltpu.PrefetchScalarGridSpec(
            num_scalar_prefetch=0,
            grid=(grid_len,),
            in_specs=[
                edge_spec(Din),           # fused [e | h_u + h_v]
                resident(Din, Dout),      # w1
                resident(1, Dout),        # b1
                resident(Dout, Dout),     # w2
                resident(1, Dout),        # b2
                resident(Dout, Dout),     # w3
                resident(1, Dout),        # b3
            ],
            out_specs=edge_spec(Dout),
        ),
        compiler_params=pltpu.CompilerParams(
            dimension_semantics=("parallel",),
            vmem_limit_bytes=32 * 1024 * 1024),
    )(x_c, w1, b1, w2, b2, w3, b3)

    return out[:E]


def _reference(atom_feats, bond_feats, src, dst, params,
               compute_dtype=jnp.float32):
    """Pure-JAX reference mirroring the kernel's dtype handling."""
    hu = jnp.take(atom_feats, src, axis=0)
    hv = jnp.take(atom_feats, dst, axis=0)
    h = jnp.concatenate([bond_feats, hu + hv], axis=1)
    for wk, bk in (("w1", "b1"), ("w2", "b2"), ("w3", "b3")):
        w = params[wk].astype(compute_dtype).astype(jnp.float32)
        hc = h.astype(compute_dtype).astype(jnp.float32)
        h = _leaky_relu(hc @ w + params[bk].astype(jnp.float32))
    return h


if __name__ == "__main__":
    # Small synthetic graph: 16 atoms, 100 edges (non-multiple of tile -> pads).
    N, E = 16, 100
    Dh, De = 32, 16          # atom-feat dim, bond-feat dim
    in_dim = De + Dh         # 48
    out_dim = 32

    key = jax.random.PRNGKey(0)
    k = jax.random.split(key, 10)

    atom_feats = jax.random.normal(k[0], (N, Dh), dtype=jnp.float32)
    bond_feats = jax.random.normal(k[1], (E, De), dtype=jnp.float32)
    src = jax.random.randint(k[2], (E,), 0, N, dtype=jnp.int32)
    dst = jax.random.randint(k[3], (E,), 0, N, dtype=jnp.int32)

    # Deterministic parameter init (nn.Linear-like shapes, stored [in, out]).
    def init_linear(kw, kb, fan_in, fan_out):
        bound = 1.0 / (fan_in ** 0.5)
        w = jax.random.uniform(kw, (fan_in, fan_out), jnp.float32, -bound, bound)
        b = jax.random.uniform(kb, (fan_out,), jnp.float32, -bound, bound)
        return w, b

    w1, b1 = init_linear(k[4], k[5], in_dim, out_dim)
    w2, b2 = init_linear(k[6], k[7], out_dim, out_dim)
    w3, b3 = init_linear(k[8], k[9], out_dim, out_dim)
    params = {"w1": w1, "b1": b1, "w2": w2, "b2": b2, "w3": w3, "b3": b3}

    # f32 operand path: tight check against the plain-JAX reference.
    out_f32 = jax.block_until_ready(
        dti_conv_graph3(atom_feats, bond_feats, src, dst, params,
                        compute_dtype=jnp.float32))
    ref_f32 = _reference(atom_feats, bond_feats, src, dst, params,
                         compute_dtype=jnp.float32)
    assert out_f32.shape == (E, out_dim)
    assert jnp.allclose(out_f32, ref_f32, atol=1e-4, rtol=1e-4), \
        "f32 path mismatch vs reference"

    # Default bf16-operand path (halved input DMA bytes, f32 accumulation):
    # compare against a reference that applies the same operand rounding.
    out_bf16 = jax.block_until_ready(
        dti_conv_graph3(atom_feats, bond_feats, src, dst, params))
    ref_bf16 = _reference(atom_feats, bond_feats, src, dst, params,
                          compute_dtype=jnp.bfloat16)
    assert out_bf16.shape == (E, out_dim)
    assert jnp.allclose(out_bf16, ref_bf16, atol=5e-3, rtol=5e-3), \
        "bf16 path mismatch vs reference"

    print("KERNEL_OK")
</pallas_src>

<mosaic_0001>
module attributes {stable_mosaic.version = 11 : i64} {
  func.func @_dti_edge_mlp_kernel(%arg0: i32, %arg1: memref<64x48xf32, #tpu.memory_space<vmem>>, %arg2: memref<48x32xf32, #tpu.memory_space<vmem>>, %arg3: memref<1x32xf32, #tpu.memory_space<vmem>>, %arg4: memref<32x32xf32, #tpu.memory_space<vmem>>, %arg5: memref<1x32xf32, #tpu.memory_space<vmem>>, %arg6: memref<32x32xf32, #tpu.memory_space<vmem>>, %arg7: memref<1x32xf32, #tpu.memory_space<vmem>>, %arg8: memref<64x32xf32, #tpu.memory_space<vmem>>) attributes {dimension_semantics = [#tpu.dimension_semantics<parallel>], iteration_bounds = array<i64: 2>, scalar_prefetch = 0 : i64, scratch_operands = 0 : i64, tpu.core_type = #tpu.core_type<tc>, window_params = [{transform_indices = @transform_0, window_bounds = array<i64: 64, 48>}, {pipeline_mode = #tpu.pipeline_mode<synchronous>, transform_indices = @transform_1, window_bounds = array<i64: 48, 32>}, {pipeline_mode = #tpu.pipeline_mode<synchronous>, transform_indices = @transform_2, window_bounds = array<i64: 1, 32>}, {pipeline_mode = #tpu.pipeline_mode<synchronous>, transform_indices = @transform_3, window_bounds = array<i64: 32, 32>}, {pipeline_mode = #tpu.pipeline_mode<synchronous>, transform_indices = @transform_4, window_bounds = array<i64: 1, 32>}, {pipeline_mode = #tpu.pipeline_mode<synchronous>, transform_indices = @transform_5, window_bounds = array<i64: 32, 32>}, {pipeline_mode = #tpu.pipeline_mode<synchronous>, transform_indices = @transform_6, window_bounds = array<i64: 1, 32>}, {transform_indices = @transform_7, window_bounds = array<i64: 64, 32>}]} {
    %c0 = arith.constant 0 : index
    %c0_0 = arith.constant 0 : index
    %0 = vector.load %arg1[%c0, %c0_0] : memref<64x48xf32, #tpu.memory_space<vmem>>, vector<64x48xf32>
    %c0_1 = arith.constant 0 : index
    %c0_2 = arith.constant 0 : index
    %1 = vector.load %arg2[%c0_1, %c0_2] : memref<48x32xf32, #tpu.memory_space<vmem>>, vector<48x32xf32>
    %cst = arith.constant dense<0.000000e+00> : vector<64x32xf32>
    %2 = tpu.matmul %0, %1, %cst {dimension_numbers = #tpu.dot_dimension_numbers<[1], [0], [0], [1], [0, 0, 1, 1], [], []>} : vector<64x48xf32>, vector<48x32xf32>, vector<64x32xf32> -> vector<64x32xf32>
    %c0_3 = arith.constant 0 : index
    %c0_4 = arith.constant 0 : index
    %3 = vector.load %arg3[%c0_3, %c0_4] : memref<1x32xf32, #tpu.memory_space<vmem>>, vector<1x32xf32>
    %4 = vector.broadcast %3 : vector<1x32xf32> to vector<64x32xf32>
    %5 = arith.addf %2, %4 : vector<64x32xf32>
    %cst_5 = arith.constant 0.000000e+00 : f32
    %6 = vector.broadcast %cst_5 : f32 to vector<64x32xf32>
    %7 = arith.cmpf ogt, %5, %6 : vector<64x32xf32>
    %cst_6 = arith.constant 0.00999999977 : f32
    %8 = vector.broadcast %cst_6 : f32 to vector<64x32xf32>
    %9 = arith.mulf %8, %5 : vector<64x32xf32>
    %10 = arith.select %7, %5, %9 : vector<64x32xi1>, vector<64x32xf32>
    %c0_7 = arith.constant 0 : index
    %c0_8 = arith.constant 0 : index
    %11 = vector.load %arg4[%c0_7, %c0_8] : memref<32x32xf32, #tpu.memory_space<vmem>>, vector<32x32xf32>
    %cst_9 = arith.constant dense<0.000000e+00> : vector<64x32xf32>
    %12 = tpu.matmul %10, %11, %cst_9 {dimension_numbers = #tpu.dot_dimension_numbers<[1], [0], [0], [1], [0, 0, 1, 1], [], []>} : vector<64x32xf32>, vector<32x32xf32>, vector<64x32xf32> -> vector<64x32xf32>
    %c0_10 = arith.constant 0 : index
    %c0_11 = arith.constant 0 : index
    %13 = vector.load %arg5[%c0_10, %c0_11] : memref<1x32xf32, #tpu.memory_space<vmem>>, vector<1x32xf32>
    %14 = vector.broadcast %13 : vector<1x32xf32> to vector<64x32xf32>
    %15 = arith.addf %12, %14 : vector<64x32xf32>
    %cst_12 = arith.constant 0.000000e+00 : f32
    %16 = vector.broadcast %cst_12 : f32 to vector<64x32xf32>
    %17 = arith.cmpf ogt, %15, %16 : vector<64x32xf32>
    %cst_13 = arith.constant 0.00999999977 : f32
    %18 = vector.broadcast %cst_13 : f32 to vector<64x32xf32>
    %19 = arith.mulf %18, %15 : vector<64x32xf32>
    %20 = arith.select %17, %15, %19 : vector<64x32xi1>, vector<64x32xf32>
    %c0_14 = arith.constant 0 : index
    %c0_15 = arith.constant 0 : index
    %21 = vector.load %arg6[%c0_14, %c0_15] : memref<32x32xf32, #tpu.memory_space<vmem>>, vector<32x32xf32>
    %cst_16 = arith.constant dense<0.000000e+00> : vector<64x32xf32>
    %22 = tpu.matmul %20, %21, %cst_16 {dimension_numbers = #tpu.dot_dimension_numbers<[1], [0], [0], [1], [0, 0, 1, 1], [], []>} : vector<64x32xf32>, vector<32x32xf32>, vector<64x32xf32> -> vector<64x32xf32>
    %c0_17 = arith.constant 0 : index
    %c0_18 = arith.constant 0 : index
    %23 = vector.load %arg7[%c0_17, %c0_18] : memref<1x32xf32, #tpu.memory_space<vmem>>, vector<1x32xf32>
    %24 = vector.broadcast %23 : vector<1x32xf32> to vector<64x32xf32>
    %25 = arith.addf %22, %24 : vector<64x32xf32>
    %cst_19 = arith.constant 0.000000e+00 : f32
    %26 = vector.broadcast %cst_19 : f32 to vector<64x32xf32>
    %27 = arith.cmpf ogt, %25, %26 : vector<64x32xf32>
    %cst_20 = arith.constant 0.00999999977 : f32
    %28 = vector.broadcast %cst_20 : f32 to vector<64x32xf32>
    %29 = arith.mulf %28, %25 : vector<64x32xf32>
    %30 = arith.select %27, %25, %29 : vector<64x32xi1>, vector<64x32xf32>
    %c0_21 = arith.constant 0 : index
    %c0_22 = arith.constant 0 : index
    %31 = vector.load %arg8[%c0_21, %c0_22] : memref<64x32xf32, #tpu.memory_space<vmem>>, vector<64x32xf32>
    tpu.vector_store %arg8[%c0_21, %c0_22], %30 {strides = array<i32>} : memref<64x32xf32, #tpu.memory_space<vmem>>, vector<64x32xf32>,
    return
  }
  func.func @transform_0(%arg0: i32) -> (i32, i32) {
    %c0_i32 = arith.constant 0 : i32
    %c0_i32_0 = arith.constant 0 : i32
    return %arg0, %c0_i32 : i32, i32
  }
  func.func @transform_1(%arg0: i32) -> (i32, i32) {
    %c0_i32 = arith.constant 0 : i32
    %c0_i32_0 = arith.constant 0 : i32
    %c0_i32_1 = arith.constant 0 : i32
    return %c0_i32, %c0_i32_0 : i32, i32
  }
  func.func @transform_2(%arg0: i32) -> (i32, i32) {
    %c0_i32 = arith.constant 0 : i32
    %c0_i32_0 = arith.constant 0 : i32
    %c0_i32_1 = arith.constant 0 : i32
    return %c0_i32, %c0_i32_0 : i32, i32
  }
  func.func @transform_3(%arg0: i32) -> (i32, i32) {
    %c0_i32 = arith.constant 0 : i32
    %c0_i32_0 = arith.constant 0 : i32
    %c0_i32_1 = arith.constant 0 : i32
    return %c0_i32, %c0_i32_0 : i32, i32
  }
  func.func @transform_4(%arg0: i32) -> (i32, i32) {
    %c0_i32 = arith.constant 0 : i32
    %c0_i32_0 = arith.constant 0 : i32
    %c0_i32_1 = arith.constant 0 : i32
    return %c0_i32, %c0_i32_0 : i32, i32
  }
  func.func @transform_5(%arg0: i32) -> (i32, i32) {
    %c0_i32 = arith.constant 0 : i32
    %c0_i32_0 = arith.constant 0 : i32
    %c0_i32_1 = arith.constant 0 : i32
    return %c0_i32, %c0_i32_0 : i32, i32
  }
  func.func @transform_6(%arg0: i32) -> (i32, i32) {
    %c0_i32 = arith.constant 0 : i32
    %c0_i32_0 = arith.constant 0 : i32
    %c0_i32_1 = arith.constant 0 : i32
    return %c0_i32, %c0_i32_0 : i32, i32
  }
  func.func @transform_7(%arg0: i32) -> (i32, i32) {
    %c0_i32 = arith.constant 0 : i32
    %c0_i32_0 = arith.constant 0 : i32
    return %arg0, %c0_i32 : i32, i32
  }
}

</mosaic_0001>

<llo_original>
// kernel: tpu_custom_call.1
$region0: #{tpu_custom_call.1}
  #allocation0 [shape = 'u32[]', space=smem, size = 0x4, offset = 0x4, fixed_abs, tag = 'smem constant byte address 0x4 - core index']
  #allocation1 [shape = 'u32[144,128]{1,0:T(1,128)}', space=vmem, size = 0x12000, scoped, tag = 'internal scratch']
  %s0 = inlined_call_operand.vmem [shape: f32[128,48], index: 0, kind: input, shape index: {}]
  %s1 = inlined_call_operand.vmem [shape: f32[48,32], index: 1, kind: input, shape index: {}]
  %s2 = inlined_call_operand.vmem [shape: f32[1,32], index: 2, kind: input, shape index: {}]
  %s3 = inlined_call_operand.vmem [shape: f32[32,32], index: 3, kind: input, shape index: {}]
  %s4 = inlined_call_operand.vmem [shape: f32[1,32], index: 4, kind: input, shape index: {}]
  %s5 = inlined_call_operand.vmem [shape: f32[32,32], index: 5, kind: input, shape index: {}]
  %s6 = inlined_call_operand.vmem [shape: f32[1,32], index: 6, kind: input, shape index: {}]
  %s7 = inlined_call_operand.vmem [shape: f32[128,32], index: 7, kind: output, shape index: {}]
  %s8 = sld [smem:[#allocation0]]
  $region61: #{tpu_custom_call.1} parent=0
    _
  %s10 = ssub.s32 1, %s8
  %s11 = scalar_select 0, %s10, %s8
  loop: start=0, step=1, limit=4
  $region2: #{tpu_custom_call.1} parent=0 // loop_pre_header
    _
  $region3: #{tpu_custom_call.1} parent=0 // loop_header
    %s13 = sphi 0, %s17
    %p14 = scmp.ge.s32.totalorder %s13, 4
    %s23 = sphi 0, %s25
    %s26 = sphi 0, %s23
    %s27 = sphi 0, %s26
    %s43 = sphi 0, %s27
    %s47 = sphi 0, %s47
    %s49 = sphi 0, %s47
    %s50 = sphi 0, %s49
    %s64 = sphi 0, %s50
    %s68 = sphi 0, %s68
    %s70 = sphi 0, %s68
    %s71 = sphi 0, %s70
    %s85 = sphi 0, %s71
    %s89 = sphi 0, %s89
    %s91 = sphi 0, %s89
    %s92 = sphi 0, %s91
    %s106 = sphi 0, %s92
    %s110 = sphi 0, %s110
    %s112 = sphi 0, %s110
    %s113 = sphi 0, %s112
    %s127 = sphi 0, %s113
    %s131 = sphi 0, %s131
    %s133 = sphi 0, %s131
    %s134 = sphi 0, %s133
    %s148 = sphi 0, %s134
    %s152 = sphi 0, %s152
    %s154 = sphi 0, %s152
    %s155 = sphi 0, %s154
    %s169 = sphi 0, %s155
    %s175 = sphi 0, %s177
    %s178 = sphi 0, %s175
    %s179 = sphi 0, %s178
    %s195 = sphi 0, %s179
  $region4: #{tpu_custom_call.1} parent=0 // loop_header_branch
    %16 = sbr.rel (%p14) target = $region8
  $region5: #{tpu_custom_call.1} parent=0 // loop_body
    %s18 = ssub.s32 %s13, 1
    %s19 = ssub.s32 %s13, 2
    %s20 = sadd.s32 %s13, 1
    %s21 = ssub.s32 %s13, %s20
    %p22 = scmp.eq.s32.totalorder %s21, 0
    %s24 = sadd.s32 %s23, 1
    %s25 = scalar_select %p22, %s23, %s24
    %p28 = pneg %p22
    %p29 = scmp.eq.s32.totalorder %s13, 1
    %p30 = por %p28, %p29
    %p31 = scmp.ne.s32.totalorder %s23, %s26
    %p32 = scmp.eq.s32.totalorder %s13, 0
    %p33 = por %p31, %p32
    %p34 = scmp.ne.s32.totalorder %s23, %s26
    %p35 = scmp.eq.s32.totalorder %s18, 1
    %p36 = por %p34, %p35
    %p37 = scmp.ne.s32.totalorder %s26, %s27
    %p38 = scmp.eq.s32.totalorder %s18, 0
    %p39 = por %p37, %p38
    %p40 = scmp.ne.s32.totalorder %s26, %s27
    %p41 = scmp.eq.s32.totalorder %s19, 1
    %p42 = por %p40, %p41
    %p44 = scmp.ne.s32.totalorder %s27, %s43
    %p45 = scmp.eq.s32.totalorder %s19, 0
    %p46 = por %p44, %p45
    %s48 = sadd.s32 %s47, 1
    %p51 = scmp.eq.s32.totalorder %s13, 1
    %p52 = scmp.ne.s32.totalorder %s47, %s49
    %p53 = scmp.eq.s32.totalorder %s13, 0
    %p54 = por %p52, %p53
    %p55 = scmp.ne.s32.totalorder %s47, %s49
    %p56 = scmp.eq.s32.totalorder %s18, 1
    %p57 = por %p55, %p56
    %p58 = scmp.ne.s32.totalorder %s49, %s50
    %p59 = scmp.eq.s32.totalorder %s18, 0
    %p60 = por %p58, %p59
    %p61 = scmp.ne.s32.totalorder %s49, %s50
    %p62 = scmp.eq.s32.totalorder %s19, 1
    %p63 = por %p61, %p62
    %p65 = scmp.ne.s32.totalorder %s50, %s64
    %p66 = scmp.eq.s32.totalorder %s19, 0
    %p67 = por %p65, %p66
    %s69 = sadd.s32 %s68, 1
    %p72 = scmp.eq.s32.totalorder %s13, 1
    %p73 = scmp.ne.s32.totalorder %s68, %s70
    %p74 = scmp.eq.s32.totalorder %s13, 0
    %p75 = por %p73, %p74
    %p76 = scmp.ne.s32.totalorder %s68, %s70
    %p77 = scmp.eq.s32.totalorder %s18, 1
    %p78 = por %p76, %p77
    %p79 = scmp.ne.s32.totalorder %s70, %s71
    %p80 = scmp.eq.s32.totalorder %s18, 0
    %p81 = por %p79, %p80
    %p82 = scmp.ne.s32.totalorder %s70, %s71
    %p83 = scmp.eq.s32.totalorder %s19, 1
    %p84 = por %p82, %p83
    %p86 = scmp.ne.s32.totalorder %s71, %s85
    %p87 = scmp.eq.s32.totalorder %s19, 0
    %p88 = por %p86, %p87
    %s90 = sadd.s32 %s89, 1
    %p93 = scmp.eq.s32.totalorder %s13, 1
    %p94 = scmp.ne.s32.totalorder %s89, %s91
    %p95 = scmp.eq.s32.totalorder %s13, 0
    %p96 = por %p94, %p95
    %p97 = scmp.ne.s32.totalorder %s89, %s91
    %p98 = scmp.eq.s32.totalorder %s18, 1
    %p99 = por %p97, %p98
    %p100 = scmp.ne.s32.totalorder %s91, %s92
    %p101 = scmp.eq.s32.totalorder %s18, 0
    %p102 = por %p100, %p101
    %p103 = scmp.ne.s32.totalorder %s91, %s92
    %p104 = scmp.eq.s32.totalorder %s19, 1
    %p105 = por %p103, %p104
    %p107 = scmp.ne.s32.totalorder %s92, %s106
    %p108 = scmp.eq.s32.totalorder %s19, 0
    %p109 = por %p107, %p108
    %s111 = sadd.s32 %s110, 1
    %p114 = scmp.eq.s32.totalorder %s13, 1
    %p115 = scmp.ne.s32.totalorder %s110, %s112
    %p116 = scmp.eq.s32.totalorder %s13, 0
    %p117 = por %p115, %p116
    %p118 = scmp.ne.s32.totalorder %s110, %s112
    %p119 = scmp.eq.s32.totalorder %s18, 1
    %p120 = por %p118, %p119
    %p121 = scmp.ne.s32.totalorder %s112, %s113
    %p122 = scmp.eq.s32.totalorder %s18, 0
    %p123 = por %p121, %p122
    %p124 = scmp.ne.s32.totalorder %s112, %s113
    %p125 = scmp.eq.s32.totalorder %s19, 1
    %p126 = por %p124, %p125
    %p128 = scmp.ne.s32.totalorder %s113, %s127
    %p129 = scmp.eq.s32.totalorder %s19, 0
    %p130 = por %p128, %p129
    %s132 = sadd.s32 %s131, 1
    %p135 = scmp.eq.s32.totalorder %s13, 1
    %p136 = scmp.ne.s32.totalorder %s131, %s133
    %p137 = scmp.eq.s32.totalorder %s13, 0
    %p138 = por %p136, %p137
    %p139 = scmp.ne.s32.totalorder %s131, %s133
    %p140 = scmp.eq.s32.totalorder %s18, 1
    %p141 = por %p139, %p140
    %p142 = scmp.ne.s32.totalorder %s133, %s134
    %p143 = scmp.eq.s32.totalorder %s18, 0
    %p144 = por %p142, %p143
    %p145 = scmp.ne.s32.totalorder %s133, %s134
    %p146 = scmp.eq.s32.totalorder %s19, 1
    %p147 = por %p145, %p146
    %p149 = scmp.ne.s32.totalorder %s134, %s148
    %p150 = scmp.eq.s32.totalorder %s19, 0
    %p151 = por %p149, %p150
    %s153 = sadd.s32 %s152, 1
    %p156 = scmp.eq.s32.totalorder %s13, 1
    %p157 = scmp.ne.s32.totalorder %s152, %s154
    %p158 = scmp.eq.s32.totalorder %s13, 0
    %p159 = por %p157, %p158
    %p160 = scmp.ne.s32.totalorder %s152, %s154
    %p161 = scmp.eq.s32.totalorder %s18, 1
    %p162 = por %p160, %p161
    %p163 = scmp.ne.s32.totalorder %s154, %s155
    %p164 = scmp.eq.s32.totalorder %s18, 0
    %p165 = por %p163, %p164
    %p166 = scmp.ne.s32.totalorder %s154, %s155
    %p167 = scmp.eq.s32.totalorder %s19, 1
    %p168 = por %p166, %p167
    %p170 = scmp.ne.s32.totalorder %s155, %s169
    %p171 = scmp.eq.s32.totalorder %s19, 0
    %p172 = por %p170, %p171
    %s173 = ssub.s32 %s13, %s20
    %p174 = scmp.eq.s32.totalorder %s173, 0
    %s176 = sadd.s32 %s175, 1
    %s177 = scalar_select %p174, %s175, %s176
    %p180 = pneg %p174
    %p181 = scmp.eq.s32.totalorder %s13, 1
    %p182 = por %p180, %p181
    %p183 = scmp.ne.s32.totalorder %s175, %s178
    %p184 = scmp.eq.s32.totalorder %s13, 0
    %p185 = por %p183, %p184
    %p186 = scmp.ne.s32.totalorder %s175, %s178
    %p187 = scmp.eq.s32.totalorder %s18, 1
    %p188 = por %p186, %p187
    %p189 = scmp.ne.s32.totalorder %s178, %s179
    %p190 = scmp.eq.s32.totalorder %s18, 0
    %p191 = por %p189, %p190
    %p192 = scmp.ne.s32.totalorder %s178, %s179
    %p193 = scmp.eq.s32.totalorder %s19, 1
    %p194 = por %p192, %p193
    %p196 = scmp.ne.s32.totalorder %s179, %s195
    %p197 = scmp.eq.s32.totalorder %s19, 0
    %p198 = por %p196, %p197
    %p199 = scmp.le.s32.totalorder 1, %s13
    %p200 = scmp.lt.s32.totalorder %s13, 3
    %p201 = pnand %p199, %p200
    %p202 = pneg %p201
    // Predicated region
    $region9: #{tpu_custom_call.1} parent=5 // pred_check
      _
    $region10: #{tpu_custom_call.1} parent=5 // pred_check_branch
      %204 = sbr.rel (%p201) target = $region12
    $region11: #{tpu_custom_call.1} parent=5 // pred_region
      %s205 = ssub.s32 %s13, 1
      // Predicated region
      $region13: #{tpu_custom_call.1} parent=11 // pred_check
        %p206 = pneg %p60
      $region14: #{tpu_custom_call.1} parent=11 // pred_check_branch
        %208 = sbr.rel (%p206) target = $region16
      $region15: #{tpu_custom_call.1} parent=11 // pred_region
        _
      $region16: #{tpu_custom_call.1} parent=11 // pred_fallthru
        _
      // Predicated region
      $region17: #{tpu_custom_call.1} parent=11 // pred_check
        %p209 = pneg %p81
      $region18: #{tpu_custom_call.1} parent=11 // pred_check_branch
        %211 = sbr.rel (%p209) target = $region20
      $region19: #{tpu_custom_call.1} parent=11 // pred_region
        _
      $region20: #{tpu_custom_call.1} parent=11 // pred_fallthru
        _
      // Predicated region
      $region21: #{tpu_custom_call.1} parent=11 // pred_check
        %p212 = pneg %p102
      $region22: #{tpu_custom_call.1} parent=11 // pred_check_branch
        %214 = sbr.rel (%p212) target = $region24
      $region23: #{tpu_custom_call.1} parent=11 // pred_region
        _
      $region24: #{tpu_custom_call.1} parent=11 // pred_fallthru
        _
      // Predicated region
      $region25: #{tpu_custom_call.1} parent=11 // pred_check
        %p215 = pneg %p123
      $region26: #{tpu_custom_call.1} parent=11 // pred_check_branch
        %217 = sbr.rel (%p215) target = $region28
      $region27: #{tpu_custom_call.1} parent=11 // pred_region
        _
      $region28: #{tpu_custom_call.1} parent=11 // pred_fallthru
        _
      // Predicated region
      $region29: #{tpu_custom_call.1} parent=11 // pred_check
        %p218 = pneg %p144
      $region30: #{tpu_custom_call.1} parent=11 // pred_check_branch
        %220 = sbr.rel (%p218) target = $region32
      $region31: #{tpu_custom_call.1} parent=11 // pred_region
        _
      $region32: #{tpu_custom_call.1} parent=11 // pred_fallthru
        _
      // Predicated region
      $region33: #{tpu_custom_call.1} parent=11 // pred_check
        %p221 = pneg %p165
      $region34: #{tpu_custom_call.1} parent=11 // pred_check_branch
        %223 = sbr.rel (%p221) target = $region36
      $region35: #{tpu_custom_call.1} parent=11 // pred_region
        _
      $region36: #{tpu_custom_call.1} parent=11 // pred_fallthru
        _
    $region12: #{tpu_custom_call.1} parent=5 // pred_fallthru
      _
    %p224 = scmp.lt.s32.totalorder %s13, 2
    // Predicated region
    $region37: #{tpu_custom_call.1} parent=5 // pred_check
      %p225 = pneg %p224
    $region38: #{tpu_custom_call.1} parent=5 // pred_check_branch
      %227 = sbr.rel (%p225) target = $region40
    $region39: #{tpu_custom_call.1} parent=5 // pred_region
      // Predicated region
      $region41: #{tpu_custom_call.1} parent=39 // pred_check
        %p228 = pneg %p33
      $region42: #{tpu_custom_call.1} parent=39 // pred_check_branch
        %230 = sbr.rel (%p228) target = $region44
      $region43: #{tpu_custom_call.1} parent=39 // pred_region
        %s231 = smul.u32 8, %s13
        %p232 = scmp.lt.s32.totalorder %s231, 15
        %s233 = scalar_select %p232, %s231, 15
        %s234 = smul.addr %s233, 8
        %s235 = scalar_lea.vmem %s0, %s234
        %s236 = smul.u32 8, %s13
      $region44: #{tpu_custom_call.1} parent=39 // pred_fallthru
        _
    $region40: #{tpu_custom_call.1} parent=5 // pred_fallthru
      _
    %p237 = scmp.le.s32.totalorder 1, %s13
    %p238 = scmp.lt.s32.totalorder %s13, 3
    %p239 = pnand %p237, %p238
    %p240 = pneg %p239
    // Predicated region
    $region45: #{tpu_custom_call.1} parent=5 // pred_check
      _
    $region46: #{tpu_custom_call.1} parent=5 // pred_check_branch
      %242 = sbr.rel (%p239) target = $region48
    $region47: #{tpu_custom_call.1} parent=5 // pred_region
      %s243 = ssub.s32 %s13, 1
      %s244 = smul.u32 8, %s18
      %p245 = scmp.lt.s32.totalorder %s244, 15
      %s246 = scalar_select %p245, %s244, 15
      %s247 = smul.addr %s246, 8
      %s248 = scalar_lea.vmem %s0, %s247
      %p249 = pneg %p39
      %p250 = pneg %p36
      %p251 = pneg %p60
      %p252 = pneg %p57
      %p253 = pneg %p81
      %p254 = pneg %p78
      %p255 = pneg %p102
      %p256 = pneg %p99
      %p257 = pneg %p123
      %p258 = pneg %p120
      %p259 = pneg %p144
      %p260 = pneg %p141
      %p261 = pneg %p165
      %p262 = pneg %p162
      %p263 = pneg %p191
      %p264 = pneg %p188
      %s265 = smul.u32 8, %s18
      %p266 = scmp.lt.s32.totalorder %s265, 15
      %s267 = scalar_select %p266, %s265, 15
      %s268 = smul.addr %s267, 8
      %s269 = scalar_lea.vmem %s7, %s268
      %s270 = smul.u32 8, %s18
      %p271 = scmp.lt.s32.totalorder %s270, 15
      %s272 = scalar_select %p271, %s270, 15
      %s273 = smul.addr %s272, 8
      %s274 = scalar_lea.vmem %s0, %s273
      %s275 = smul.u32 8, %s18
      %s276 = smul.u32 8, %s18
      %p277 = scmp.lt.s32.totalorder %s276, 15
      %s278 = scalar_select %p277, %s276, 15
      %s279 = smul.addr %s278, 8
      %s280 = scalar_lea.vmem %s7, %s279
      %s281 = smul.u32 8, %s18
      %v282 = vld [vmem:[%s274] sm:$0xff]
      %v283 = vld [vmem:[%s274 + $0x8] sm:$0xff]
      %v284 = vld [vmem:[%s274 + $0x10] sm:$0xff]
      %v285 = vld [vmem:[%s274 + $0x18] sm:$0xff]
      %v286 = vld [vmem:[%s274 + $0x20] sm:$0xff]
      %v287 = vld [vmem:[%s274 + $0x28] sm:$0xff]
      %v288 = vld [vmem:[%s274 + $0x30] sm:$0xff]
      %v289 = vld [vmem:[%s274 + $0x38] sm:$0xff]
      %v290 = vld [vmem:[%s1] sm:$0xff]
      %v291 = vld [vmem:[%s1 + $0x8] sm:$0xff]
      %v292 = vld [vmem:[%s1 + $0x10] sm:$0xff]
      %v293 = vld [vmem:[%s1 + $0x18] sm:$0xff]
      %v294 = vld [vmem:[%s1 + $0x20] sm:$0xff]
      %v295 = vld [vmem:[%s1 + $0x28] sm:$0xff]
      %v296 = vld [vmem:[%s2] sm:$0x1]
      %v298 = vlaneseq
      %v299 = vshrl.u32 %v298, 7
      %v300 = vsub.s32 0, %v299
      %v301 = vrot.slane %v296, %v300
      %vm303 = vcmask 392192
      %v305 = vsel %vm303, %v282, 0
      %v308 = vsel %vm303, %v283, 0
      %v311 = vsel %vm303, %v284, 0
      %v314 = vsel %vm303, %v285, 0
      %v317 = vsel %vm303, %v286, 0
      %v320 = vsel %vm303, %v287, 0
      %v323 = vsel %vm303, %v288, 0
      %v326 = vsel %vm303, %v289, 0
      %328 = vmatprep.subr.mxu0 0.0
      %329 = vmatpush1.msra.mxu0 0.0
      %330 = vmatprep.subr.mxu0 0.0
      %331 = vmatpush1.msra.mxu0 0.0
      %332 = vmatprep.subr.mxu0 0.0
      %333 = vmatpush1.msra.mxu0 0.0
      %334 = vmatprep.subr.mxu0 0.0
      %335 = vmatpush1.msra.mxu0 0.0
      %336 = vmatprep.subr.mxu0 0.0
      %337 = vmatpush1.msra.mxu0 0.0
      %338 = vmatprep.subr.mxu0 0.0
      %339 = vmatpush1.msra.mxu0 0.0
      %340 = vmatprep.subr.mxu0 0.0
      %341 = vmatpush1.msra.mxu0 0.0
      %342 = vmatprep.subr.mxu0 0.0
      %343 = vmatpush1.msra.mxu0 0.0
      %344 = vmatprep.subr.mxu0 0.0
      %345 = vmatpush1.msra.mxu0 0.0
      %346 = vmatprep.subr.mxu0 0.0
      %347 = vmatpush1.msra.mxu0 0.0
      %348 = vmatprep.subr.mxu0 0.0
      %349 = vmatpush1.msra.mxu0 %v295
      %350 = vmatprep.subr.mxu0 0.0
      %351 = vmatpush1.msra.mxu0 %v294
      %352 = vmatprep.subr.mxu0 0.0
      %353 = vmatpush1.msra.mxu0 %v293
      %354 = vmatprep.subr.mxu0 0.0
      %355 = vmatpush1.msra.mxu0 %v292
      %356 = vmatprep.subr.mxu0 0.0
      %357 = vmatpush1.msra.mxu0 %v291
      %358 = vmatprep.subr.mxu0 0.0
      %359 = vmatpush1.msra.mxu0 %v290
      %360 = vmatprep.subr.mxu0 0.0
      %361 = vmatpush2.msra.mxu0 0.0
      %362 = vmatprep.subr.mxu0 0.0
      %363 = vmatpush2.msra.mxu0 0.0
      %364 = vmatprep.subr.mxu0 0.0
      %365 = vmatpush2.msra.mxu0 0.0
      %366 = vmatprep.subr.mxu0 0.0
      %367 = vmatpush2.msra.mxu0 0.0
      %368 = vmatprep.subr.mxu0 0.0
      %369 = vmatpush2.msra.mxu0 0.0
      %370 = vmatprep.subr.mxu0 0.0
      %371 = vmatpush2.msra.mxu0 0.0
      %372 = vmatprep.subr.mxu0 0.0
      %373 = vmatpush2.msra.mxu0 0.0
      %374 = vmatprep.subr.mxu0 0.0
      %375 = vmatpush2.msra.mxu0 0.0
      %376 = vmatprep.subr.mxu0 0.0
      %377 = vmatpush2.msra.mxu0 0.0
      %378 = vmatprep.subr.mxu0 0.0
      %379 = vmatpush2.msra.mxu0 0.0
      %380 = vmatprep.subr.mxu0 0.0
      %381 = vmatpush2.msra.mxu0 0.0
      %382 = vmatprep.subr.mxu0 0.0
      %383 = vmatpush2.msra.mxu0 0.0
      %384 = vmatprep.subr.mxu0 0.0
      %385 = vmatpush2.msra.mxu0 0.0
      %386 = vmatprep.subr.mxu0 0.0
      %387 = vmatpush2.msra.mxu0 0.0
      %388 = vmatprep.subr.mxu0 0.0
      %389 = vmatpush2.msra.mxu0 0.0
      %390 = vmatprep.subr.mxu0 0.0
      %391 = vmatpush2.msra.mxu0 0.0
      %392 = vmatprep.mubr.f32.mxu0 0.0
      %393 = vmatmul.mubr.f32.gmra.mxu0 %v305
      %v394 = vpop.f32.mrf.mxu0
      %v395 = vadd.f32 %v301, %v394
      %v396 = vpop.f32.mrf.mxu0
      %397 = vmatprep.mubr.f32.mxu0 0.0
      %398 = vmatmul.mubr.f32.gmra.mxu0 %v308
      %v399 = vpop.f32.mrf.mxu0
      %v400 = vadd.f32 %v301, %v399
      %v401 = vpop.f32.mrf.mxu0
      %402 = vmatprep.mubr.f32.mxu0 0.0
      %403 = vmatmul.mubr.f32.gmra.mxu0 %v311
      %v404 = vpop.f32.mrf.mxu0
      %v405 = vadd.f32 %v301, %v404
      %v406 = vpop.f32.mrf.mxu0
      %407 = vmatprep.mubr.f32.mxu0 0.0
      %408 = vmatmul.mubr.f32.gmra.mxu0 %v314
      %v409 = vpop.f32.mrf.mxu0
      %v410 = vadd.f32 %v301, %v409
      %v411 = vpop.f32.mrf.mxu0
      %412 = vmatprep.mubr.f32.mxu0 0.0
      %413 = vmatmul.mubr.f32.gmra.mxu0 %v317
      %v414 = vpop.f32.mrf.mxu0
      %v415 = vadd.f32 %v301, %v414
      %v416 = vpop.f32.mrf.mxu0
      %417 = vmatprep.mubr.f32.mxu0 0.0
      %418 = vmatmul.mubr.f32.gmra.mxu0 %v320
      %v419 = vpop.f32.mrf.mxu0
      %v420 = vadd.f32 %v301, %v419
      %v421 = vpop.f32.mrf.mxu0
      %422 = vmatprep.mubr.f32.mxu0 0.0
      %423 = vmatmul.mubr.f32.gmra.mxu0 %v323
      %v424 = vpop.f32.mrf.mxu0
      %v425 = vadd.f32 %v301, %v424
      %v426 = vpop.f32.mrf.mxu0
      %427 = vmatprep.mubr.f32.mxu0 0.0
      %428 = vmatmul.mubr.f32.gmra.mxu0 %v326
      %v429 = vpop.f32.mrf.mxu0
      %v430 = vadd.f32 %v301, %v429
      %v431 = vpop.f32.mrf.mxu0
      %432 = vdwg.mxu0
      %vm433 = vcmp.gt.f32.partialorder %v395, 0.0
      %vm434 = vcmp.gt.f32.partialorder %v400, 0.0
      %vm435 = vcmp.gt.f32.partialorder %v405, 0.0
      %vm436 = vcmp.gt.f32.partialorder %v410, 0.0
      %vm437 = vcmp.gt.f32.partialorder %v415, 0.0
      %vm438 = vcmp.gt.f32.partialorder %v420, 0.0
      %vm439 = vcmp.gt.f32.partialorder %v425, 0.0
      %vm440 = vcmp.gt.f32.partialorder %v430, 0.0
      %v441 = vmul.f32 %v395, 0.01
      %v442 = vmul.f32 %v400, 0.01
      %v443 = vmul.f32 %v405, 0.01
      %v444 = vmul.f32 %v410, 0.01
      %v445 = vmul.f32 %v415, 0.01
      %v446 = vmul.f32 %v420, 0.01
      %v447 = vmul.f32 %v425, 0.01
      %v448 = vmul.f32 %v430, 0.01
      %v449 = vsel %vm433, %v395, %v441
      %v450 = vsel %vm434, %v400, %v442
      %v451 = vsel %vm435, %v405, %v443
      %v452 = vsel %vm436, %v410, %v444
      %v453 = vsel %vm437, %v415, %v445
      %v454 = vsel %vm438, %v420, %v446
      %v455 = vsel %vm439, %v425, %v447
      %v456 = vsel %vm440, %v430, %v448
      %v457 = vld [vmem:[%s3] sm:$0xff]
      %v458 = vld [vmem:[%s3 + $0x8] sm:$0xff]
      %v459 = vld [vmem:[%s3 + $0x10] sm:$0xff]
      %v460 = vld [vmem:[%s3 + $0x18] sm:$0xff]
      %v461 = vld [vmem:[%s4] sm:$0x1]
      %v463 = vlaneseq
      %v464 = vshrl.u32 %v463, 7
      %v465 = vsub.s32 0, %v464
      %v466 = vrot.slane %v461, %v465
      %vm468 = vcmask 261120
      %v470 = vsel %vm468, %v449, 0
      %v473 = vsel %vm468, %v450, 0
      %v476 = vsel %vm468, %v451, 0
      %v479 = vsel %vm468, %v452, 0
      %v482 = vsel %vm468, %v453, 0
      %v485 = vsel %vm468, %v454, 0
      %v488 = vsel %vm468, %v455, 0
      %v491 = vsel %vm468, %v456, 0
      %493 = vmatprep.subr.mxu0 0.0
      %494 = vmatpush1.msra.mxu0 0.0
      %495 = vmatprep.subr.mxu0 0.0
      %496 = vmatpush1.msra.mxu0 0.0
      %497 = vmatprep.subr.mxu0 0.0
      %498 = vmatpush1.msra.mxu0 0.0
      %499 = vmatprep.subr.mxu0 0.0
      %500 = vmatpush1.msra.mxu0 0.0
      %501 = vmatprep.subr.mxu0 0.0
      %502 = vmatpush1.msra.mxu0 0.0
      %503 = vmatprep.subr.mxu0 0.0
      %504 = vmatpush1.msra.mxu0 0.0
      %505 = vmatprep.subr.mxu0 0.0
      %506 = vmatpush1.msra.mxu0 0.0
      %507 = vmatprep.subr.mxu0 0.0
      %508 = vmatpush1.msra.mxu0 0.0
      %509 = vmatprep.subr.mxu0 0.0
      %510 = vmatpush1.msra.mxu0 0.0
      %511 = vmatprep.subr.mxu0 0.0
      %512 = vmatpush1.msra.mxu0 0.0
      %513 = vmatprep.subr.mxu0 0.0
      %514 = vmatpush1.msra.mxu0 0.0
      %515 = vmatprep.subr.mxu0 0.0
      %516 = vmatpush1.msra.mxu0 0.0
      %517 = vmatprep.subr.mxu0 0.0
      %518 = vmatpush1.msra.mxu0 %v460
      %519 = vmatprep.subr.mxu0 0.0
      %520 = vmatpush1.msra.mxu0 %v459
      %521 = vmatprep.subr.mxu0 0.0
      %522 = vmatpush1.msra.mxu0 %v458
      %523 = vmatprep.subr.mxu0 0.0
      %524 = vmatpush1.msra.mxu0 %v457
      %525 = vmatprep.subr.mxu0 0.0
      %526 = vmatpush2.msra.mxu0 0.0
      %527 = vmatprep.subr.mxu0 0.0
      %528 = vmatpush2.msra.mxu0 0.0
      %529 = vmatprep.subr.mxu0 0.0
      %530 = vmatpush2.msra.mxu0 0.0
      %531 = vmatprep.subr.mxu0 0.0
      %532 = vmatpush2.msra.mxu0 0.0
      %533 = vmatprep.subr.mxu0 0.0
      %534 = vmatpush2.msra.mxu0 0.0
      %535 = vmatprep.subr.mxu0 0.0
      %536 = vmatpush2.msra.mxu0 0.0
      %537 = vmatprep.subr.mxu0 0.0
      %538 = vmatpush2.msra.mxu0 0.0
      %539 = vmatprep.subr.mxu0 0.0
      %540 = vmatpush2.msra.mxu0 0.0
      %541 = vmatprep.subr.mxu0 0.0
      %542 = vmatpush2.msra.mxu0 0.0
      %543 = vmatprep.subr.mxu0 0.0
      %544 = vmatpush2.msra.mxu0 0.0
      %545 = vmatprep.subr.mxu0 0.0
      %546 = vmatpush2.msra.mxu0 0.0
      %547 = vmatprep.subr.mxu0 0.0
      %548 = vmatpush2.msra.mxu0 0.0
      %549 = vmatprep.subr.mxu0 0.0
      %550 = vmatpush2.msra.mxu0 0.0
      %551 = vmatprep.subr.mxu0 0.0
      %552 = vmatpush2.msra.mxu0 0.0
      %553 = vmatprep.subr.mxu0 0.0
      %554 = vmatpush2.msra.mxu0 0.0
      %555 = vmatprep.subr.mxu0 0.0
      %556 = vmatpush2.msra.mxu0 0.0
      %557 = vmatprep.mubr.f32.mxu0 0.0
      %558 = vmatmul.mubr.f32.gmra.mxu0 %v470
      %v559 = vpop.f32.mrf.mxu0
      %v560 = vadd.f32 %v466, %v559
      %v561 = vpop.f32.mrf.mxu0
      %562 = vmatprep.mubr.f32.mxu0 0.0
      %563 = vmatmul.mubr.f32.gmra.mxu0 %v473
      %v564 = vpop.f32.mrf.mxu0
      %v565 = vadd.f32 %v466, %v564
      %v566 = vpop.f32.mrf.mxu0
      %567 = vmatprep.mubr.f32.mxu0 0.0
      %568 = vmatmul.mubr.f32.gmra.mxu0 %v476
      %v569 = vpop.f32.mrf.mxu0
      %v570 = vadd.f32 %v466, %v569
      %v571 = vpop.f32.mrf.mxu0
      %572 = vmatprep.mubr.f32.mxu0 0.0
      %573 = vmatmul.mubr.f32.gmra.mxu0 %v479
      %v574 = vpop.f32.mrf.mxu0
      %v575 = vadd.f32 %v466, %v574
      %v576 = vpop.f32.mrf.mxu0
      %577 = vmatprep.mubr.f32.mxu0 0.0
      %578 = vmatmul.mubr.f32.gmra.mxu0 %v482
      %v579 = vpop.f32.mrf.mxu0
      %v580 = vadd.f32 %v466, %v579
      %v581 = vpop.f32.mrf.mxu0
      %582 = vmatprep.mubr.f32.mxu0 0.0
      %583 = vmatmul.mubr.f32.gmra.mxu0 %v485
      %v584 = vpop.f32.mrf.mxu0
      %v585 = vadd.f32 %v466, %v584
      %v586 = vpop.f32.mrf.mxu0
      %587 = vmatprep.mubr.f32.mxu0 0.0
      %588 = vmatmul.mubr.f32.gmra.mxu0 %v488
      %v589 = vpop.f32.mrf.mxu0
      %v590 = vadd.f32 %v466, %v589
      %v591 = vpop.f32.mrf.mxu0
      %592 = vmatprep.mubr.f32.mxu0 0.0
      %593 = vmatmul.mubr.f32.gmra.mxu0 %v491
      %v594 = vpop.f32.mrf.mxu0
      %v595 = vadd.f32 %v466, %v594
      %v596 = vpop.f32.mrf.mxu0
      %597 = vdwg.mxu0
      %vm598 = vcmp.gt.f32.partialorder %v560, 0.0
      %vm599 = vcmp.gt.f32.partialorder %v565, 0.0
      %vm600 = vcmp.gt.f32.partialorder %v570, 0.0
      %vm601 = vcmp.gt.f32.partialorder %v575, 0.0
      %vm602 = vcmp.gt.f32.partialorder %v580, 0.0
      %vm603 = vcmp.gt.f32.partialorder %v585, 0.0
      %vm604 = vcmp.gt.f32.partialorder %v590, 0.0
      %vm605 = vcmp.gt.f32.partialorder %v595, 0.0
      %v606 = vmul.f32 %v560, 0.01
      %v607 = vmul.f32 %v565, 0.01
      %v608 = vmul.f32 %v570, 0.01
      %v609 = vmul.f32 %v575, 0.01
      %v610 = vmul.f32 %v580, 0.01
      %v611 = vmul.f32 %v585, 0.01
      %v612 = vmul.f32 %v590, 0.01
      %v613 = vmul.f32 %v595, 0.01
      %v614 = vsel %vm598, %v560, %v606
      %v615 = vsel %vm599, %v565, %v607
      %v616 = vsel %vm600, %v570, %v608
      %v617 = vsel %vm601, %v575, %v609
      %v618 = vsel %vm602, %v580, %v610
      %v619 = vsel %vm603, %v585, %v611
      %v620 = vsel %vm604, %v590, %v612
      %v621 = vsel %vm605, %v595, %v613
      %v622 = vld [vmem:[%s5] sm:$0xff]
      %v623 = vld [vmem:[%s5 + $0x8] sm:$0xff]
      %v624 = vld [vmem:[%s5 + $0x10] sm:$0xff]
      %v625 = vld [vmem:[%s5 + $0x18] sm:$0xff]
      %v626 = vld [vmem:[%s6] sm:$0x1]
      %v628 = vlaneseq
      %v629 = vshrl.u32 %v628, 7
      %v630 = vsub.s32 0, %v629
      %v631 = vrot.slane %v626, %v630
      %v634 = vsel %vm468, %v614, 0
      %v637 = vsel %vm468, %v615, 0
      %v640 = vsel %vm468, %v616, 0
      %v643 = vsel %vm468, %v617, 0
      %v646 = vsel %vm468, %v618, 0
      %v649 = vsel %vm468, %v619, 0
      %v652 = vsel %vm468, %v620, 0
      %v655 = vsel %vm468, %v621, 0
      %657 = vmatprep.subr.mxu0 0.0
      %658 = vmatpush1.msra.mxu0 0.0
      %659 = vmatprep.subr.mxu0 0.0
      %660 = vmatpush1.msra.mxu0 0.0
      %661 = vmatprep.subr.mxu0 0.0
      %662 = vmatpush1.msra.mxu0 0.0
      %663 = vmatprep.subr.mxu0 0.0
      %664 = vmatpush1.msra.mxu0 0.0
      %665 = vmatprep.subr.mxu0 0.0
      %666 = vmatpush1.msra.mxu0 0.0
      %667 = vmatprep.subr.mxu0 0.0
      %668 = vmatpush1.msra.mxu0 0.0
      %669 = vmatprep.subr.mxu0 0.0
      %670 = vmatpush1.msra.mxu0 0.0
      %671 = vmatprep.subr.mxu0 0.0
      %672 = vmatpush1.msra.mxu0 0.0
      %673 = vmatprep.subr.mxu0 0.0
      %674 = vmatpush1.msra.mxu0 0.0
      %675 = vmatprep.subr.mxu0 0.0
      %676 = vmatpush1.msra.mxu0 0.0
      %677 = vmatprep.subr.mxu0 0.0
      %678 = vmatpush1.msra.mxu0 0.0
      %679 = vmatprep.subr.mxu0 0.0
      %680 = vmatpush1.msra.mxu0 0.0
      %681 = vmatprep.subr.mxu0 0.0
      %682 = vmatpush1.msra.mxu0 %v625
      %683 = vmatprep.subr.mxu0 0.0
      %684 = vmatpush1.msra.mxu0 %v624
      %685 = vmatprep.subr.mxu0 0.0
      %686 = vmatpush1.msra.mxu0 %v623
      %687 = vmatprep.subr.mxu0 0.0
      %688 = vmatpush1.msra.mxu0 %v622
      %689 = vmatprep.subr.mxu0 0.0
      %690 = vmatpush2.msra.mxu0 0.0
      %691 = vmatprep.subr.mxu0 0.0
      %692 = vmatpush2.msra.mxu0 0.0
      %693 = vmatprep.subr.mxu0 0.0
      %694 = vmatpush2.msra.mxu0 0.0
      %695 = vmatprep.subr.mxu0 0.0
      %696 = vmatpush2.msra.mxu0 0.0
      %697 = vmatprep.subr.mxu0 0.0
      %698 = vmatpush2.msra.mxu0 0.0
      %699 = vmatprep.subr.mxu0 0.0
      %700 = vmatpush2.msra.mxu0 0.0
      %701 = vmatprep.subr.mxu0 0.0
      %702 = vmatpush2.msra.mxu0 0.0
      %703 = vmatprep.subr.mxu0 0.0
      %704 = vmatpush2.msra.mxu0 0.0
      %705 = vmatprep.subr.mxu0 0.0
      %706 = vmatpush2.msra.mxu0 0.0
      %707 = vmatprep.subr.mxu0 0.0
      %708 = vmatpush2.msra.mxu0 0.0
      %709 = vmatprep.subr.mxu0 0.0
      %710 = vmatpush2.msra.mxu0 0.0
      %711 = vmatprep.subr.mxu0 0.0
      %712 = vmatpush2.msra.mxu0 0.0
      %713 = vmatprep.subr.mxu0 0.0
      %714 = vmatpush2.msra.mxu0 0.0
      %715 = vmatprep.subr.mxu0 0.0
      %716 = vmatpush2.msra.mxu0 0.0
      %717 = vmatprep.subr.mxu0 0.0
      %718 = vmatpush2.msra.mxu0 0.0
      %719 = vmatprep.subr.mxu0 0.0
      %720 = vmatpush2.msra.mxu0 0.0
      %721 = vmatprep.mubr.f32.mxu0 0.0
      %722 = vmatmul.mubr.f32.gmra.mxu0 %v634
      %v723 = vpop.f32.mrf.mxu0
      %v724 = vadd.f32 %v631, %v723
      %v725 = vpop.f32.mrf.mxu0
      %726 = vmatprep.mubr.f32.mxu0 0.0
      %727 = vmatmul.mubr.f32.gmra.mxu0 %v637
      %v728 = vpop.f32.mrf.mxu0
      %v729 = vadd.f32 %v631, %v728
      %v730 = vpop.f32.mrf.mxu0
      %731 = vmatprep.mubr.f32.mxu0 0.0
      %732 = vmatmul.mubr.f32.gmra.mxu0 %v640
      %v733 = vpop.f32.mrf.mxu0
      %v734 = vadd.f32 %v631, %v733
      %v735 = vpop.f32.mrf.mxu0
      %736 = vmatprep.mubr.f32.mxu0 0.0
      %737 = vmatmul.mubr.f32.gmra.mxu0 %v643
      %v738 = vpop.f32.mrf.mxu0
      %v739 = vadd.f32 %v631, %v738
      %v740 = vpop.f32.mrf.mxu0
      %741 = vmatprep.mubr.f32.mxu0 0.0
      %742 = vmatmul.mubr.f32.gmra.mxu0 %v646
      %v743 = vpop.f32.mrf.mxu0
      %v744 = vadd.f32 %v631, %v743
      %v745 = vpop.f32.mrf.mxu0
      %746 = vmatprep.mubr.f32.mxu0 0.0
      %747 = vmatmul.mubr.f32.gmra.mxu0 %v649
      %v748 = vpop.f32.mrf.mxu0
      %v749 = vadd.f32 %v631, %v748
      %v750 = vpop.f32.mrf.mxu0
      %751 = vmatprep.mubr.f32.mxu0 0.0
      %752 = vmatmul.mubr.f32.gmra.mxu0 %v652
      %v753 = vpop.f32.mrf.mxu0
      %v754 = vadd.f32 %v631, %v753
      %v755 = vpop.f32.mrf.mxu0
      %756 = vmatprep.mubr.f32.mxu0 0.0
      %757 = vmatmul.mubr.f32.gmra.mxu0 %v655
      %v758 = vpop.f32.mrf.mxu0
      %v759 = vadd.f32 %v631, %v758
      %v760 = vpop.f32.mrf.mxu0
      %761 = vdwg.mxu0
      %vm762 = vcmp.gt.f32.partialorder %v724, 0.0
      %vm763 = vcmp.gt.f32.partialorder %v729, 0.0
      %vm764 = vcmp.gt.f32.partialorder %v734, 0.0
      %vm765 = vcmp.gt.f32.partialorder %v739, 0.0
      %vm766 = vcmp.gt.f32.partialorder %v744, 0.0
      %vm767 = vcmp.gt.f32.partialorder %v749, 0.0
      %vm768 = vcmp.gt.f32.partialorder %v754, 0.0
      %vm769 = vcmp.gt.f32.partialorder %v759, 0.0
      %v770 = vmul.f32 %v724, 0.01
      %v771 = vmul.f32 %v729, 0.01
      %v772 = vmul.f32 %v734, 0.01
      %v773 = vmul.f32 %v739, 0.01
      %v774 = vmul.f32 %v744, 0.01
      %v775 = vmul.f32 %v749, 0.01
      %v776 = vmul.f32 %v754, 0.01
      %v777 = vmul.f32 %v759, 0.01
      %v778 = vsel %vm762, %v724, %v770
      %v779 = vsel %vm763, %v729, %v771
      %v780 = vsel %vm764, %v734, %v772
      %v781 = vsel %vm765, %v739, %v773
      %v782 = vsel %vm766, %v744, %v774
      %v783 = vsel %vm767, %v749, %v775
      %v784 = vsel %vm768, %v754, %v776
      %v785 = vsel %vm769, %v759, %v777
      %786 = vst.msk [vmem:[%s280] sm:$0xff] %vm468, %v778
      %787 = vst.msk [vmem:[%s280 + $0x8] sm:$0xff] %vm468, %v779
      %788 = vst.msk [vmem:[%s280 + $0x10] sm:$0xff] %vm468, %v780
      %789 = vst.msk [vmem:[%s280 + $0x18] sm:$0xff] %vm468, %v781
      %790 = vst.msk [vmem:[%s280 + $0x20] sm:$0xff] %vm468, %v782
      %791 = vst.msk [vmem:[%s280 + $0x28] sm:$0xff] %vm468, %v783
      %792 = vst.msk [vmem:[%s280 + $0x30] sm:$0xff] %vm468, %v784
      %793 = vst.msk [vmem:[%s280 + $0x38] sm:$0xff] %vm468, %v785
      %s794 = smul.u32 8, %s18
      %p795 = scmp.lt.s32.totalorder %s794, 15
      %s796 = scalar_select %p795, %s794, 15
      %s797 = smul.addr %s796, 8
      %s798 = scalar_lea.vmem %s7, %s797
      // Predicated region
      $region49: #{tpu_custom_call.1} parent=47 // pred_check
        %p799 = pneg %p188
      $region50: #{tpu_custom_call.1} parent=47 // pred_check_branch
        %801 = sbr.rel (%p799) target = $region52
      $region51: #{tpu_custom_call.1} parent=47 // pred_region
        %s802 = smul.u32 8, %s18
      $region52: #{tpu_custom_call.1} parent=47 // pred_fallthru
        _
    $region48: #{tpu_custom_call.1} parent=5 // pred_fallthru
      _
    %p803 = scmp.le.s32.totalorder 2, %s13
    // Predicated region
    $region53: #{tpu_custom_call.1} parent=5 // pred_check
      %p804 = pneg %p803
    $region54: #{tpu_custom_call.1} parent=5 // pred_check_branch
      %806 = sbr.rel (%p804) target = $region56
    $region55: #{tpu_custom_call.1} parent=5 // pred_region
      %s807 = ssub.s32 %s13, 2
      // Predicated region
      $region57: #{tpu_custom_call.1} parent=55 // pred_check
        %p808 = pneg %p194
      $region58: #{tpu_custom_call.1} parent=55 // pred_check_branch
        %810 = sbr.rel (%p808) target = $region60
      $region59: #{tpu_custom_call.1} parent=55 // pred_region
        %s811 = smul.u32 8, %s19
        %p812 = scmp.lt.s32.totalorder %s811, 15
        %s813 = scalar_select %p812, %s811, 15
        %s814 = smul.addr %s813, 8
        %s815 = scalar_lea.vmem %s7, %s814
      $region60: #{tpu_custom_call.1} parent=55 // pred_fallthru
        _
    $region56: #{tpu_custom_call.1} parent=5 // pred_fallthru
      _
  $region6: #{tpu_custom_call.1} parent=0 // loop_footer
    %s17 = sadd.s32 1, %s13
  $region7: #{tpu_custom_call.1} parent=0 // loop_footer_branch
    %12 = sbr.rel target = $region3
  $region8: #{tpu_custom_call.1} parent=0 // loop_exit
    _

</llo_original>
